<compile_context>
chip_gen: v7x
topology: tpu7x:2x2x1
jax: 0.10.0
libtpu: 0.0.40
codegen_flags: <defaults>
</compile_context>

<pallas_src>
import functools

import jax
import jax.numpy as jnp
from jax import lax
from jax.experimental import pallas as pl
from jax.experimental.pallas import tpu as pltpu


def _round_up(x, m):
    return (x + m - 1) // m * m


def _cdiv(a, b):
    return (a + b - 1) // b


def _device_kind():
    try:
        return jax.devices()[0].device_kind.lower()
    except Exception:
        return ""


def _distance_loss_kernel(idx_ref, prob_ref, m2_ref, out_ref, s_ref, *, batch_size):
    g = pl.program_id(1)  # row-block (reduction) axis; axis 0 is the per-core split

    @pl.when(g == 0)
    def _init():
        s_ref[...] = jnp.zeros_like(s_ref)

    tm = prob_ref.shape[0]
    n_loc = prob_ref.shape[1]

    # One-hot scatter matrix, built transposed so the contraction is an NN matmul,
    # directly in bf16 (exact for 0/1 values):
    #   one_hot_t[l, r] = (idx[r] == l).  Padded rows have idx == -1 -> all zeros.
    idx_row = idx_ref[...]                                        # (1, tm) int32
    loc_iota = lax.broadcasted_iota(jnp.int32, (n_loc, tm), 0)    # (n_loc, tm)
    one_hot_t = (loc_iota == idx_row).astype(jnp.bfloat16)        # (n_loc, tm) bf16

    # exp on the EUP in f32 (exact), then cast to bf16 for the MXU.
    # (On v6e/v7x the EUP also has a bf16 path; kept f32 here for v5e + accuracy.)
    p = jnp.exp(prob_ref[...]).astype(jnp.bfloat16)               # (tm, n_loc) bf16

    # S[l, j] += sum_r [idx[r] == l] * exp(prob[r, j])
    # Single bf16 MXU matmul per step with f32 accumulation; precision pinned so
    # performance/accuracy are deterministic across v5e/v6e/v7x.
    s_ref[...] += jnp.dot(one_hot_t, p,
                          preferred_element_type=jnp.float32,
                          precision=lax.Precision.DEFAULT)

    # M2 elementwise + cross-lane reduction happen exactly once per core.
    @pl.when(g == pl.num_programs(1) - 1)
    def _finalize():
        prod = s_ref[...] * m2_ref[...]                           # (n_loc, n_loc)
        col = jnp.sum(prod, axis=1, keepdims=True)                # (n_loc, 1)
        tot = jnp.sum(col, axis=0, keepdims=True)                 # (1, 1)
        # Lane-dense (1,128) partial-output block; every lane carries the value.
        out_ref[...] = jnp.broadcast_to(tot / batch_size, out_ref.shape)


def distance_loss_forward(prob, samples, start_time, M2, window_size, *,
                          block_rows=None):
    """prob: (B*W, n_locations) float32 log-probs; samples: (B, seq_len) int."""
    batch_size = samples.shape[0]
    idx = samples[:, start_time:start_time + window_size].reshape(-1).astype(jnp.int32)

    prob = prob.astype(jnp.float32)
    M2 = M2.astype(jnp.float32)
    n_rows, n_loc = prob.shape
    assert n_rows == batch_size * window_size
    assert M2.shape == (n_loc, n_loc)

    kind = _device_kind()
    is_v7 = ("v7" in kind) or ("tpu7" in kind)

    # Row-block size: big blocks amortize the ~0.35us per-step pipeline overhead.
    # For small n_loc (<=512) use tm up to 2048 (still only ~2 MiB double-buffered
    # prob); tm is a multiple of 128 whenever there is more than one block.
    if block_rows is not None:
        tm_cap = block_rows                      # test hook (must be mult. of 128)
    elif n_loc <= 512:
        tm_cap = 2048
    elif n_loc <= 1024:
        tm_cap = 1024
    else:
        tm_cap = 512
    tm = tm_cap if n_rows >= tm_cap else _round_up(n_rows, 8)

    n_blocks = _cdiv(n_rows, tm)
    # Leading "parallel" axis with per-core partial sums: exploits both TCs on
    # 2-TC chips (v7x); on single-TC chips it is just an outer sequential split.
    n_cores = 2 if n_blocks >= 2 else 1
    half = _cdiv(n_blocks, n_cores)
    n_rows_pad = n_cores * half * tm
    grid = (n_cores, half)

    # Pad rows; padded idx entries are -1 so they contribute nothing.
    if n_rows_pad != n_rows:
        prob = jnp.pad(prob, ((0, n_rows_pad - n_rows), (0, 0)))
        idx = jnp.pad(idx, (0, n_rows_pad - n_rows), constant_values=-1)
    idx2d = idx.reshape(1, n_rows_pad)

    kernel = functools.partial(_distance_loss_kernel, batch_size=batch_size)

    # Explicit VMEM budget: double-buffered prob + idx, resident M2 (constant
    # index_map -> loaded once, but allocated double-buffered), S scratch, plus
    # the in-kernel one-hot (bf16) and exp (f32+bf16) temporaries and headroom.
    vmem_bytes = (2 * tm * n_loc * 4                 # prob, double-buffered
                  + 2 * _round_up(tm, 128) * 4       # idx, double-buffered
                  + 2 * n_loc * n_loc * 4            # M2 (2 bufs allocated)
                  + n_loc * n_loc * 4                # S scratch
                  + n_loc * tm * 2                   # one-hot (bf16) temp
                  + tm * n_loc * 6                   # exp f32 + bf16 temps
                  + (4 << 20))                       # compiler headroom
    # Cap below physical VMEM: 64 MiB/TC on v7x -> cap 48 MiB; 128 MiB on
    # v5e/v6e -> allow up to 100 MiB.
    vmem_cap = (48 << 20) if is_v7 else (100 << 20)
    vmem_limit = int(min(max(vmem_bytes, 16 << 20), vmem_cap))

    # TODO(synk): for n_loc >~ 1-2K, single-buffer M2 (pipeline_mode=pl.Buffered(1))
    # and tile the S accumulator's column dim (or switch to a DMA gather of M2 rows).

    out = pl.pallas_call(
        kernel,
        out_shape=jax.ShapeDtypeStruct((1, n_cores * 128), jnp.float32),
        grid_spec=pltpu.PrefetchScalarGridSpec(
            num_scalar_prefetch=0,
            grid=grid,
            in_specs=[
                # idx, lane-major so the kernel can sublane-broadcast it
                pl.BlockSpec((1, tm), lambda c, g: (0, c * half + g)),
                # prob rows, streamed
                pl.BlockSpec((tm, n_loc), lambda c, g: (c * half + g, 0)),
                # M2, resident (constant index map -> no re-DMA per step)
                pl.BlockSpec((n_loc, n_loc), lambda c, g: (0, 0)),
            ],
            # one lane-dense (1,128) partial per core; summed in the wrapper
            out_specs=pl.BlockSpec((1, 128), lambda c, g: (0, c)),
            scratch_shapes=[pltpu.VMEM((n_loc, n_loc), jnp.float32)],
        ),
        compiler_params=pltpu.CompilerParams(
            dimension_semantics=("parallel", "arbitrary"),
            vmem_limit_bytes=vmem_limit),
    )(idx2d, prob, M2)

    partials = out.reshape(n_cores, 128)[:, 0]
    return jnp.sum(partials)


if __name__ == "__main__":
    key = jax.random.PRNGKey(0)
    k_prob, k_samp, k_m2 = jax.random.split(key, 3)

    # small, deterministic synthetic setup consistent with the module
    batch_size = 2
    seq_len = 8
    window_size = 4
    n_locations = 128
    start_time = 1

    # generated sequence token ids (locations)
    samples = jax.random.randint(k_samp, (batch_size, seq_len), 0, n_locations,
                                 dtype=jnp.int32)
    # log-probabilities over locations for the sliced window
    logits = jax.random.normal(k_prob, (batch_size * window_size, n_locations),
                               dtype=jnp.float32)
    prob = jax.nn.log_softmax(logits, axis=-1)
    # synthetic pairwise distance matrix M2 (deterministic, no checkpoint load)
    M2 = jnp.abs(jax.random.normal(k_m2, (n_locations, n_locations),
                                   dtype=jnp.float32))

    loss = distance_loss_forward(prob, samples, start_time, M2, window_size)
    loss = jax.block_until_ready(loss)

    # pure-JAX reference check (bf16 MXU path -> ~1e-3 relative error budget)
    idx = samples[:, start_time:start_time + window_size].reshape(-1)
    ref = jnp.sum(jnp.exp(prob) * M2[idx]) / batch_size
    assert jnp.allclose(loss, ref, rtol=1e-2, atol=1e-2), (loss, ref)

    # second (still small) check exercising multi-block + two-partial-sum
    # ("parallel" axis) path + row padding, forced via a small block_rows.
    b2, w2, st2 = 16, 40, 3                      # n_rows = 640 -> 3 blocks of 256
    s2 = jax.random.randint(jax.random.PRNGKey(1), (b2, 64), 0, n_locations,
                            dtype=jnp.int32)
    lg2 = jax.random.normal(jax.random.PRNGKey(2), (b2 * w2, n_locations),
                            dtype=jnp.float32)
    p2 = jax.nn.log_softmax(lg2, axis=-1)
    loss2 = jax.block_until_ready(
        distance_loss_forward(p2, s2, st2, M2, w2, block_rows=256))
    i2 = s2[:, st2:st2 + w2].reshape(-1)
    ref2 = jnp.sum(jnp.exp(p2) * M2[i2]) / b2
    assert jnp.allclose(loss2, ref2, rtol=1e-2, atol=1e-2), (loss2, ref2)

    print("KERNEL_OK")
</pallas_src>

<mosaic_0001>
module attributes {stable_mosaic.version = 11 : i64} {
  func.func @_distance_loss_kernel(%arg0: i32, %arg1: i32, %arg2: memref<1x8xi32, #tpu.memory_space<vmem>>, %arg3: memref<8x128xf32, #tpu.memory_space<vmem>>, %arg4: memref<128x128xf32, #tpu.memory_space<vmem>>, %arg5: memref<1x128xf32, #tpu.memory_space<vmem>>, %arg6: memref<128x128xf32, #tpu.memory_space<vmem>>) attributes {dimension_semantics = [#tpu.dimension_semantics<parallel>, #tpu.dimension_semantics<arbitrary>], iteration_bounds = array<i64: 1, 1>, scalar_prefetch = 0 : i64, scratch_operands = 1 : i64, tpu.core_type = #tpu.core_type<tc>, window_params = [{transform_indices = @transform_0, window_bounds = array<i64: 1, 8>}, {transform_indices = @transform_1, window_bounds = array<i64: 8, 128>}, {pipeline_mode = #tpu.pipeline_mode<synchronous>, transform_indices = @transform_2, window_bounds = array<i64: 128, 128>}, {transform_indices = @transform_3, window_bounds = array<i64: 1, 128>}]} {
    %c0_i32 = arith.constant 0 : i32
    %0 = arith.cmpi eq, %arg1, %c0_i32 : i32
    %1 = arith.extui %0 : i1 to i32
    %c0_i32_0 = arith.constant 0 : i32
    %2 = arith.cmpi ne, %1, %c0_i32_0 : i32
    scf.if %2 {
      %cst_10 = arith.constant 0.000000e+00 : f32
      %20 = vector.broadcast %cst_10 : f32 to vector<128x128xf32>
      %c0_11 = arith.constant 0 : index
      %c0_12 = arith.constant 0 : index
      %21 = vector.load %arg6[%c0_11, %c0_12] : memref<128x128xf32, #tpu.memory_space<vmem>>, vector<128x128xf32>
      tpu.vector_store %arg6[%c0_11, %c0_12], %20 {strides = array<i32>} : memref<128x128xf32, #tpu.memory_space<vmem>>, vector<128x128xf32>,
    } else {
    }
    %c0 = arith.constant 0 : index
    %c0_1 = arith.constant 0 : index
    %3 = vector.load %arg2[%c0, %c0_1] : memref<1x8xi32, #tpu.memory_space<vmem>>, vector<1x8xi32>
    %4 = tpu.iota {dimensions = array<i32: 0>} : vector<128x8xi32>
    %5 = vector.broadcast %3 : vector<1x8xi32> to vector<128x8xi32>
    %6 = arith.cmpi eq, %4, %5 : vector<128x8xi32>
    %7 = arith.extui %6 : vector<128x8xi1> to vector<128x8xi32>
    %8 = arith.sitofp %7 : vector<128x8xi32> to vector<128x8xf32>
    %9 = arith.truncf %8 : vector<128x8xf32> to vector<128x8xbf16>
    %c0_2 = arith.constant 0 : index
    %c0_3 = arith.constant 0 : index
    %10 = vector.load %arg3[%c0_2, %c0_3] : memref<8x128xf32, #tpu.memory_space<vmem>>, vector<8x128xf32>
    %11 = math.exp %10 : vector<8x128xf32>
    %12 = arith.truncf %11 : vector<8x128xf32> to vector<8x128xbf16>
    %c0_4 = arith.constant 0 : index
    %c0_5 = arith.constant 0 : index
    %13 = vector.load %arg6[%c0_4, %c0_5] : memref<128x128xf32, #tpu.memory_space<vmem>>, vector<128x128xf32>
    %cst = arith.constant dense<0.000000e+00> : vector<128x128xf32>
    %14 = tpu.matmul %9, %12, %cst {dimension_numbers = #tpu.dot_dimension_numbers<[1], [0], [0], [1], [0, 0, 1, 1], [], []>} : vector<128x8xbf16>, vector<8x128xbf16>, vector<128x128xf32> -> vector<128x128xf32>
    %15 = arith.addf %13, %14 : vector<128x128xf32>
    %c0_6 = arith.constant 0 : index
    %c0_7 = arith.constant 0 : index
    %16 = vector.load %arg6[%c0_6, %c0_7] : memref<128x128xf32, #tpu.memory_space<vmem>>, vector<128x128xf32>
    tpu.vector_store %arg6[%c0_6, %c0_7], %15 {strides = array<i32>} : memref<128x128xf32, #tpu.memory_space<vmem>>, vector<128x128xf32>,
    %c0_i32_8 = arith.constant 0 : i32
    %17 = arith.cmpi eq, %arg1, %c0_i32_8 : i32
    %18 = arith.extui %17 : i1 to i32
    %c0_i32_9 = arith.constant 0 : i32
    %19 = arith.cmpi ne, %18, %c0_i32_9 : i32
    scf.if %19 {
      %c0_10 = arith.constant 0 : index
      %c0_11 = arith.constant 0 : index
      %20 = vector.load %arg6[%c0_10, %c0_11] : memref<128x128xf32, #tpu.memory_space<vmem>>, vector<128x128xf32>
      %c0_12 = arith.constant 0 : index
      %c0_13 = arith.constant 0 : index
      %21 = vector.load %arg4[%c0_12, %c0_13] : memref<128x128xf32, #tpu.memory_space<vmem>>, vector<128x128xf32>
      %22 = arith.mulf %20, %21 : vector<128x128xf32>
      %cst_14 = arith.constant dense<0.000000e+00> : vector<128xf32>
      %23 = vector.multi_reduction <add>, %22, %cst_14 [1] : vector<128x128xf32> to vector<128xf32>
      %24 = vector.shape_cast %23 : vector<128xf32> to vector<128x1xf32>
      %cst_15 = arith.constant dense<0.000000e+00> : vector<1xf32>
      %25 = vector.multi_reduction <add>, %24, %cst_15 [0] : vector<128x1xf32> to vector<1xf32>
      %26 = vector.shape_cast %25 : vector<1xf32> to vector<1x1xf32>
      %cst_16 = arith.constant 2.000000e+00 : f32
      %27 = vector.broadcast %cst_16 : f32 to vector<1x1xf32>
      %28 = arith.divf %26, %27 : vector<1x1xf32>
      %29 = vector.shape_cast %28 : vector<1x1xf32> to vector<1x1xf32>
      %30 = vector.broadcast %29 : vector<1x1xf32> to vector<1x128xf32>
      %c0_17 = arith.constant 0 : index
      %c0_18 = arith.constant 0 : index
      %31 = vector.load %arg5[%c0_17, %c0_18] : memref<1x128xf32, #tpu.memory_space<vmem>>, vector<1x128xf32>
      tpu.vector_store %arg5[%c0_17, %c0_18], %30 {strides = array<i32>} : memref<1x128xf32, #tpu.memory_space<vmem>>, vector<1x128xf32>,
    } else {
    }
    return
  }
  func.func @transform_0(%arg0: i32, %arg1: i32) -> (i32, i32) {
    %c1_i32 = arith.constant 1 : i32
    %0 = arith.muli %arg0, %c1_i32 : i32
    %1 = arith.addi %0, %arg1 : i32
    %c0_i32 = arith.constant 0 : i32
    %c0_i32_0 = arith.constant 0 : i32
    return %c0_i32, %1 : i32, i32
  }
  func.func @transform_1(%arg0: i32, %arg1: i32) -> (i32, i32) {
    %c1_i32 = arith.constant 1 : i32
    %0 = arith.muli %arg0, %c1_i32 : i32
    %1 = arith.addi %0, %arg1 : i32
    %c0_i32 = arith.constant 0 : i32
    %c0_i32_0 = arith.constant 0 : i32
    return %1, %c0_i32 : i32, i32
  }
  func.func @transform_2(%arg0: i32, %arg1: i32) -> (i32, i32) {
    %c0_i32 = arith.constant 0 : i32
    %c0_i32_0 = arith.constant 0 : i32
    %c0_i32_1 = arith.constant 0 : i32
    return %c0_i32, %c0_i32_0 : i32, i32
  }
  func.func @transform_3(%arg0: i32, %arg1: i32) -> (i32, i32) {
    %c0_i32 = arith.constant 0 : i32
    %c0_i32_0 = arith.constant 0 : i32
    return %c0_i32, %arg0 : i32, i32
  }
}

</mosaic_0001>

<llo_original>
// kernel: tpu_custom_call.1
$region0: #{tpu_custom_call.1}
  #allocation0 [shape = 'u32[]', space=smem, size = 0x4, offset = 0x4, fixed_abs, tag = 'smem constant byte address 0x4 - core index']
  #allocation1 [shape = 'u32[144,128]{1,0:T(1,128)}', space=vmem, size = 0x12000, scoped, tag = 'internal scratch']
  #allocation2 [shape = 'f32[128,128]{1,0:T(8,128)}', space=vmem, size = 0x10000, scoped, tag = 'scratch operand']
  %s0 = inlined_call_operand.hbm [shape: s32[1,8], index: 0, kind: input, shape index: {}]
  %s1 = inlined_call_operand.hbm [shape: f32[8,128], index: 1, kind: input, shape index: {}]
  %s2 = inlined_call_operand.hbm [shape: f32[128,128], index: 2, kind: input, shape index: {}]
  %s3 = inlined_call_operand.hbm [shape: f32[1,128], index: 3, kind: output, shape index: {}]
  %s4 = sld [smem:[#allocation0]]
  $region42: #{tpu_custom_call.1} parent=0
    _
  %s6 = ssub.s32 1, %s4
  %s7 = scalar_select 0, %s6, %s4
  $region1: #{tpu_custom_call.1} parent=0
    #allocation3 [shape = 'u8[512]{0}', space=vmem, size = 0x400, scoped, tag = 'input window, operand 0, single buffered']
    #allocation4 [shape = 's32[1]{0}', space=sflag, size = 0x4, scoped, tag = 'scoped memory for tpu_custom_call.1']
    #allocation5 [shape = 's32[1]{0}', space=sflag, size = 0x4, scoped, tag = 'scoped memory for tpu_custom_call.1']
    #allocation6 [shape = 'u8[4096]{0}', space=vmem, size = 0x1000, scoped, tag = 'input window, operand 1, single buffered']
    #allocation7 [shape = 's32[1]{0}', space=sflag, size = 0x4, scoped, tag = 'scoped memory for tpu_custom_call.1']
    #allocation8 [shape = 'u8[65536]{0}', space=vmem, size = 0x10000, scoped, tag = 'input window, operand 2, single buffered']
    #allocation9 [shape = 'u8[512]{0}', space=vmem, size = 0x400, scoped, tag = 'output window, operand 0, single buffered']
    %8 = vsyncpa [#allocation4], 0
    %9 = vsyncpa [#allocation7], 0
    %10 = vsyncpa [#allocation5], 0
    // Predicated region
    $region2: #{tpu_custom_call.1} parent=1 // pred_check
      _
    $region3: #{tpu_custom_call.1} parent=1 // pred_check_branch
      %12 = sbr.rel (0) target = $region5
    $region4: #{tpu_custom_call.1} parent=1 // pred_region
      %s13 = sadd.s32 0, 0
      %s15 = ssub.s32 16, 16
      %16 = vsyncadd [#allocation4], %s15
      %s17 = smul.addr %s13, 16
      %s18 = scalar_lea.hbm %s0, %s17
      %s20 = sshll.u32 [#allocation3], 4
      %s21 = int_to_ptr.vmem [resolvable:$true] %s20
      %23 = dma.hbm_to_vmem [thread:$0]  %s18, 16, %s21, [#allocation4]
    $region5: #{tpu_custom_call.1} parent=1 // pred_fallthru
      _
    // Predicated region
    $region6: #{tpu_custom_call.1} parent=1 // pred_check
      _
    $region7: #{tpu_custom_call.1} parent=1 // pred_check_branch
      %25 = sbr.rel (0) target = $region9
    $region8: #{tpu_custom_call.1} parent=1 // pred_region
      %s26 = sadd.s32 0, 0
      %s28 = ssub.s32 128, 128
      %29 = vsyncadd [#allocation7], %s28
      %s30 = smul.addr %s26, 128
      %s31 = scalar_lea.hbm %s1, %s30
      %s33 = sshll.u32 [#allocation6], 4
      %s34 = int_to_ptr.vmem [resolvable:$true] %s33
      %36 = dma.hbm_to_vmem [thread:$0]  %s31, 128, %s34, [#allocation7]
    $region9: #{tpu_custom_call.1} parent=1 // pred_fallthru
      _
    // Predicated region
    $region10: #{tpu_custom_call.1} parent=1 // pred_check
      _
    $region11: #{tpu_custom_call.1} parent=1 // pred_check_branch
      %38 = sbr.rel (0) target = $region13
    $region12: #{tpu_custom_call.1} parent=1 // pred_region
      %s40 = ssub.s32 2048, 2048
      %41 = vsyncadd [#allocation7], %s40
      %s42 = sshll.u32 [#allocation8], 4
      %s43 = int_to_ptr.vmem [resolvable:$true] %s42
      %48 = dma.hbm_to_vmem [thread:$0]  %s2, 2048, %s43, [#allocation7], 128, 128, 8
    $region13: #{tpu_custom_call.1} parent=1 // pred_fallthru
      _
    // Predicated region
    $region14: #{tpu_custom_call.1} parent=1 // pred_check
      _
    $region15: #{tpu_custom_call.1} parent=1 // pred_check_branch
      %50 = sbr.rel (0) target = $region17
    $region16: #{tpu_custom_call.1} parent=1 // pred_region
      %51 = dma.done [#allocation4], 16
    $region17: #{tpu_custom_call.1} parent=1 // pred_fallthru
      _
    // Predicated region
    $region18: #{tpu_custom_call.1} parent=1 // pred_check
      _
    $region19: #{tpu_custom_call.1} parent=1 // pred_check_branch
      %53 = sbr.rel (0) target = $region21
    $region20: #{tpu_custom_call.1} parent=1 // pred_region
      %54 = dma.done [#allocation7], 128
    $region21: #{tpu_custom_call.1} parent=1 // pred_fallthru
      _
    // Predicated region
    $region22: #{tpu_custom_call.1} parent=1 // pred_check
      _
    $region23: #{tpu_custom_call.1} parent=1 // pred_check_branch
      %56 = sbr.rel (0) target = $region25
    $region24: #{tpu_custom_call.1} parent=1 // pred_region
      %57 = dma.done [#allocation7], 2048
    $region25: #{tpu_custom_call.1} parent=1 // pred_fallthru
      _
    %s58 = sadd.s32 0, 0
    %s59 = sadd.s32 0, 0
    %p61 = scmp.eq.s32.totalorder 0, 0
    // Predicated region
    $region26: #{tpu_custom_call.1} parent=1 // pred_check
      %p62 = pneg %p61
    $region27: #{tpu_custom_call.1} parent=1 // pred_check_branch
      %64 = sbr.rel (%p62) target = $region29
    $region28: #{tpu_custom_call.1} parent=1 // pred_region
      %65 = vst [vmem:[#allocation2] sm:$0xff] 0.0
      %66 = vst [vmem:[#allocation2 + $0x8] sm:$0xff] 0.0
      %67 = vst [vmem:[#allocation2 + $0x10] sm:$0xff] 0.0
      %68 = vst [vmem:[#allocation2 + $0x18] sm:$0xff] 0.0
      %69 = vst [vmem:[#allocation2 + $0x20] sm:$0xff] 0.0
      %70 = vst [vmem:[#allocation2 + $0x28] sm:$0xff] 0.0
      %71 = vst [vmem:[#allocation2 + $0x30] sm:$0xff] 0.0
      %72 = vst [vmem:[#allocation2 + $0x38] sm:$0xff] 0.0
      %73 = vst [vmem:[#allocation2 + $0x40] sm:$0xff] 0.0
      %74 = vst [vmem:[#allocation2 + $0x48] sm:$0xff] 0.0
      %75 = vst [vmem:[#allocation2 + $0x50] sm:$0xff] 0.0
      %76 = vst [vmem:[#allocation2 + $0x58] sm:$0xff] 0.0
      %77 = vst [vmem:[#allocation2 + $0x60] sm:$0xff] 0.0
      %78 = vst [vmem:[#allocation2 + $0x68] sm:$0xff] 0.0
      %79 = vst [vmem:[#allocation2 + $0x70] sm:$0xff] 0.0
      %80 = vst [vmem:[#allocation2 + $0x78] sm:$0xff] 0.0
    $region29: #{tpu_custom_call.1} parent=1 // pred_fallthru
      _
    %v81 = vld [vmem:[#allocation3] sm:$0x1]
    %v82 = vlaneseq
    %v83 = vshrl.u32 %v82, 7
    %v84 = vadd.s32 %v83, 8
    %v85 = vadd.s32 %v83, 16
    %v86 = vadd.s32 %v83, 24
    %v87 = vadd.s32 %v83, 32
    %v88 = vadd.s32 %v83, 40
    %v89 = vadd.s32 %v83, 48
    %v90 = vadd.s32 %v83, 56
    %v91 = vadd.s32 %v83, 64
    %v92 = vadd.s32 %v83, 72
    %v93 = vadd.s32 %v83, 80
    %v94 = vadd.s32 %v83, 88
    %v95 = vadd.s32 %v83, 96
    %v96 = vadd.s32 %v83, 104
    %v97 = vadd.s32 %v83, 112
    %v98 = vadd.s32 %v83, 120
    %v99 = vlaneseq
    %v100 = vshrl.u32 %v99, 7
    %v101 = vsub.s32 0, %v100
    %v102 = vrot.slane %v81, %v101
    %vm103 = vcmp.eq.s32.totalorder %v83, %v102
    %vm104 = vcmp.eq.s32.totalorder %v84, %v102
    %vm105 = vcmp.eq.s32.totalorder %v85, %v102
    %vm106 = vcmp.eq.s32.totalorder %v86, %v102
    %vm107 = vcmp.eq.s32.totalorder %v87, %v102
    %vm108 = vcmp.eq.s32.totalorder %v88, %v102
    %vm109 = vcmp.eq.s32.totalorder %v89, %v102
    %vm110 = vcmp.eq.s32.totalorder %v90, %v102
    %vm111 = vcmp.eq.s32.totalorder %v91, %v102
    %vm112 = vcmp.eq.s32.totalorder %v92, %v102
    %vm113 = vcmp.eq.s32.totalorder %v93, %v102
    %vm114 = vcmp.eq.s32.totalorder %v94, %v102
    %vm115 = vcmp.eq.s32.totalorder %v95, %v102
    %vm116 = vcmp.eq.s32.totalorder %v96, %v102
    %vm117 = vcmp.eq.s32.totalorder %v97, %v102
    %vm118 = vcmp.eq.s32.totalorder %v98, %v102
    %v119 = vsel %vm103, 1, 0
    %v120 = vsel %vm104, 1, 0
    %v121 = vsel %vm105, 1, 0
    %v122 = vsel %vm106, 1, 0
    %v123 = vsel %vm107, 1, 0
    %v124 = vsel %vm108, 1, 0
    %v125 = vsel %vm109, 1, 0
    %v126 = vsel %vm110, 1, 0
    %v127 = vsel %vm111, 1, 0
    %v128 = vsel %vm112, 1, 0
    %v129 = vsel %vm113, 1, 0
    %v130 = vsel %vm114, 1, 0
    %v131 = vsel %vm115, 1, 0
    %v132 = vsel %vm116, 1, 0
    %v133 = vsel %vm117, 1, 0
    %v134 = vsel %vm118, 1, 0
    %v135 = vcvt.s32.f32 %v119
    %v136 = vcvt.s32.f32 %v120
    %v137 = vcvt.s32.f32 %v121
    %v138 = vcvt.s32.f32 %v122
    %v139 = vcvt.s32.f32 %v123
    %v140 = vcvt.s32.f32 %v124
    %v141 = vcvt.s32.f32 %v125
    %v142 = vcvt.s32.f32 %v126
    %v143 = vcvt.s32.f32 %v127
    %v144 = vcvt.s32.f32 %v128
    %v145 = vcvt.s32.f32 %v129
    %v146 = vcvt.s32.f32 %v130
    %v147 = vcvt.s32.f32 %v131
    %v148 = vcvt.s32.f32 %v132
    %v149 = vcvt.s32.f32 %v133
    %v150 = vcvt.s32.f32 %v134
    %v151 = vpack.c.bf16 %v136, %v135
    %v152 = vpack.c.bf16 %v138, %v137
    %v153 = vpack.c.bf16 %v140, %v139
    %v154 = vpack.c.bf16 %v142, %v141
    %v155 = vpack.c.bf16 %v144, %v143
    %v156 = vpack.c.bf16 %v146, %v145
    %v157 = vpack.c.bf16 %v148, %v147
    %v158 = vpack.c.bf16 %v150, %v149
    %v159 = vld [vmem:[#allocation6] sm:$0xff]
    %v160 = vmul.f32 %v159, 1.442695
    %v161 = vpow.pop %v160
    %v162 = vpack.c.bf16 %v161, %v161
    %v163 = vld [vmem:[#allocation2] sm:$0xff]
    %v164 = vld [vmem:[#allocation2 + $0x8] sm:$0xff]
    %v165 = vld [vmem:[#allocation2 + $0x10] sm:$0xff]
    %v166 = vld [vmem:[#allocation2 + $0x18] sm:$0xff]
    %v167 = vld [vmem:[#allocation2 + $0x20] sm:$0xff]
    %v168 = vld [vmem:[#allocation2 + $0x28] sm:$0xff]
    %v169 = vld [vmem:[#allocation2 + $0x30] sm:$0xff]
    %v170 = vld [vmem:[#allocation2 + $0x38] sm:$0xff]
    %v171 = vld [vmem:[#allocation2 + $0x40] sm:$0xff]
    %v172 = vld [vmem:[#allocation2 + $0x48] sm:$0xff]
    %v173 = vld [vmem:[#allocation2 + $0x50] sm:$0xff]
    %v174 = vld [vmem:[#allocation2 + $0x58] sm:$0xff]
    %v175 = vld [vmem:[#allocation2 + $0x60] sm:$0xff]
    %v176 = vld [vmem:[#allocation2 + $0x68] sm:$0xff]
    %v177 = vld [vmem:[#allocation2 + $0x70] sm:$0xff]
    %v178 = vld [vmem:[#allocation2 + $0x78] sm:$0xff]
    %vm179 = vcmask 64512
    %v181 = vsel %vm179, %v151, 0
    %v184 = vsel %vm179, %v152, 0
    %v187 = vsel %vm179, %v153, 0
    %v190 = vsel %vm179, %v154, 0
    %v193 = vsel %vm179, %v155, 0
    %v196 = vsel %vm179, %v156, 0
    %v199 = vsel %vm179, %v157, 0
    %v202 = vsel %vm179, %v158, 0
    %vm204 = vcmask 1043456
    %v206 = vsel %vm204, %v162, 0
    %208 = vmatprep.subr.bf16.mxu0 0
    %209 = vmatpush1.bf16.msra.mxu0 %v206
    %210 = vmatprep.subr.bf16.mxu0 0
    %211 = vmatpush1.bf16.msra.mxu0 0
    %212 = vmatprep.subr.bf16.mxu0 0
    %213 = vmatpush1.bf16.msra.mxu0 0
    %214 = vmatprep.subr.bf16.mxu0 0
    %215 = vmatpush1.bf16.msra.mxu0 0
    %216 = vmatprep.subr.bf16.mxu0 0
    %217 = vmatpush1.bf16.msra.mxu0 0
    %218 = vmatprep.subr.bf16.mxu0 0
    %219 = vmatpush1.bf16.msra.mxu0 0
    %220 = vmatprep.subr.bf16.mxu0 0
    %221 = vmatpush1.bf16.msra.mxu0 0
    %222 = vmatprep.subr.bf16.mxu0 0
    %223 = vmatpush1.bf16.msra.mxu0 0
    %224 = vmatprep.subr.bf16.mxu0 0
    %225 = vmatpush1.bf16.msra.mxu0 0
    %226 = vmatprep.subr.bf16.mxu0 0
    %227 = vmatpush1.bf16.msra.mxu0 0
    %228 = vmatprep.subr.bf16.mxu0 0
    %229 = vmatpush1.bf16.msra.mxu0 0
    %230 = vmatprep.subr.bf16.mxu0 0
    %231 = vmatpush1.bf16.msra.mxu0 0
    %232 = vmatprep.subr.bf16.mxu0 0
    %233 = vmatpush1.bf16.msra.mxu0 0
    %234 = vmatprep.subr.bf16.mxu0 0
    %235 = vmatpush1.bf16.msra.mxu0 0
    %236 = vmatprep.subr.bf16.mxu0 0
    %237 = vmatpush1.bf16.msra.mxu0 0
    %238 = vmatprep.subr.bf16.mxu0 0
    %239 = vmatpush1.bf16.msra.mxu0 0
    %240 = vmatprep.mubr.bf16.mxu0 0
    %241 = vmatmul.mubr.bf16.gmra.mrb[0].mxu0 %v181
    %v242 = vpop.f32.mrb[0].mxu0
    %v243 = vadd.f32 0.0, %v242
    %v244 = vpop.f32.mrb[0].mxu0
    %v245 = vpop.f32.mrb[0].mxu0
    %v246 = vadd.f32 0.0, %v245
    %v247 = vpop.f32.mrb[0].mxu0
    %248 = vmatprep.mubr.bf16.mxu0 0
    %249 = vmatmul.mubr.bf16.gmra.mrb[0].mxu0 %v184
    %v250 = vpop.f32.mrb[0].mxu0
    %v251 = vadd.f32 0.0, %v250
    %v252 = vpop.f32.mrb[0].mxu0
    %v253 = vpop.f32.mrb[0].mxu0
    %v254 = vadd.f32 0.0, %v253
    %v255 = vpop.f32.mrb[0].mxu0
    %256 = vmatprep.mubr.bf16.mxu0 0
    %257 = vmatmul.mubr.bf16.gmra.mrb[0].mxu0 %v187
    %v258 = vpop.f32.mrb[0].mxu0
    %v259 = vadd.f32 0.0, %v258
    %v260 = vpop.f32.mrb[0].mxu0
    %v261 = vpop.f32.mrb[0].mxu0
    %v262 = vadd.f32 0.0, %v261
    %v263 = vpop.f32.mrb[0].mxu0
    %264 = vmatprep.mubr.bf16.mxu0 0
    %265 = vmatmul.mubr.bf16.gmra.mrb[0].mxu0 %v190
    %v266 = vpop.f32.mrb[0].mxu0
    %v267 = vadd.f32 0.0, %v266
    %v268 = vpop.f32.mrb[0].mxu0
    %v269 = vpop.f32.mrb[0].mxu0
    %v270 = vadd.f32 0.0, %v269
    %v271 = vpop.f32.mrb[0].mxu0
    %272 = vmatprep.mubr.bf16.mxu0 0
    %273 = vmatmul.mubr.bf16.gmra.mrb[0].mxu0 %v193
    %v274 = vpop.f32.mrb[0].mxu0
    %v275 = vadd.f32 0.0, %v274
    %v276 = vpop.f32.mrb[0].mxu0
    %v277 = vpop.f32.mrb[0].mxu0
    %v278 = vadd.f32 0.0, %v277
    %v279 = vpop.f32.mrb[0].mxu0
    %280 = vmatprep.mubr.bf16.mxu0 0
    %281 = vmatmul.mubr.bf16.gmra.mrb[0].mxu0 %v196
    %v282 = vpop.f32.mrb[0].mxu0
    %v283 = vadd.f32 0.0, %v282
    %v284 = vpop.f32.mrb[0].mxu0
    %v285 = vpop.f32.mrb[0].mxu0
    %v286 = vadd.f32 0.0, %v285
    %v287 = vpop.f32.mrb[0].mxu0
    %288 = vmatprep.mubr.bf16.mxu0 0
    %289 = vmatmul.mubr.bf16.gmra.mrb[0].mxu0 %v199
    %v290 = vpop.f32.mrb[0].mxu0
    %v291 = vadd.f32 0.0, %v290
    %v292 = vpop.f32.mrb[0].mxu0
    %v293 = vpop.f32.mrb[0].mxu0
    %v294 = vadd.f32 0.0, %v293
    %v295 = vpop.f32.mrb[0].mxu0
    %296 = vmatprep.mubr.bf16.mxu0 0
    %297 = vmatmul.mubr.bf16.gmra.mrb[0].mxu0 %v202
    %v298 = vpop.f32.mrb[0].mxu0
    %v299 = vadd.f32 0.0, %v298
    %v300 = vpop.f32.mrb[0].mxu0
    %v301 = vpop.f32.mrb[0].mxu0
    %v302 = vadd.f32 0.0, %v301
    %v303 = vpop.f32.mrb[0].mxu0
    %304 = vdwg.mxu0
    %v305 = vadd.f32 %v163, %v243
    %v306 = vadd.f32 %v164, %v246
    %v307 = vadd.f32 %v165, %v251
    %v308 = vadd.f32 %v166, %v254
    %v309 = vadd.f32 %v167, %v259
    %v310 = vadd.f32 %v168, %v262
    %v311 = vadd.f32 %v169, %v267
    %v312 = vadd.f32 %v170, %v270
    %v313 = vadd.f32 %v171, %v275
    %v314 = vadd.f32 %v172, %v278
    %v315 = vadd.f32 %v173, %v283
    %v316 = vadd.f32 %v174, %v286
    %v317 = vadd.f32 %v175, %v291
    %v318 = vadd.f32 %v176, %v294
    %v319 = vadd.f32 %v177, %v299
    %v320 = vadd.f32 %v178, %v302
    %321 = vst [vmem:[#allocation2] sm:$0xff] %v305
    %322 = vst [vmem:[#allocation2 + $0x8] sm:$0xff] %v306
    %323 = vst [vmem:[#allocation2 + $0x10] sm:$0xff] %v307
    %324 = vst [vmem:[#allocation2 + $0x18] sm:$0xff] %v308
    %325 = vst [vmem:[#allocation2 + $0x20] sm:$0xff] %v309
    %326 = vst [vmem:[#allocation2 + $0x28] sm:$0xff] %v310
    %327 = vst [vmem:[#allocation2 + $0x30] sm:$0xff] %v311
    %328 = vst [vmem:[#allocation2 + $0x38] sm:$0xff] %v312
    %329 = vst [vmem:[#allocation2 + $0x40] sm:$0xff] %v313
    %330 = vst [vmem:[#allocation2 + $0x48] sm:$0xff] %v314
    %331 = vst [vmem:[#allocation2 + $0x50] sm:$0xff] %v315
    %332 = vst [vmem:[#allocation2 + $0x58] sm:$0xff] %v316
    %333 = vst [vmem:[#allocation2 + $0x60] sm:$0xff] %v317
    %334 = vst [vmem:[#allocation2 + $0x68] sm:$0xff] %v318
    %335 = vst [vmem:[#allocation2 + $0x70] sm:$0xff] %v319
    %336 = vst [vmem:[#allocation2 + $0x78] sm:$0xff] %v320
    // Predicated region
    $region30: #{tpu_custom_call.1} parent=1 // pred_check
      %p337 = pneg %p61
    $region31: #{tpu_custom_call.1} parent=1 // pred_check_branch
      %339 = sbr.rel (%p337) target = $region33
    $region32: #{tpu_custom_call.1} parent=1 // pred_region
      %v340 = vld [vmem:[#allocation2] sm:$0xff]
      %v341 = vld [vmem:[#allocation2 + $0x8] sm:$0xff]
      %v342 = vld [vmem:[#allocation2 + $0x10] sm:$0xff]
      %v343 = vld [vmem:[#allocation2 + $0x18] sm:$0xff]
      %v344 = vld [vmem:[#allocation2 + $0x20] sm:$0xff]
      %v345 = vld [vmem:[#allocation2 + $0x28] sm:$0xff]
      %v346 = vld [vmem:[#allocation2 + $0x30] sm:$0xff]
      %v347 = vld [vmem:[#allocation2 + $0x38] sm:$0xff]
      %v348 = vld [vmem:[#allocation2 + $0x40] sm:$0xff]
      %v349 = vld [vmem:[#allocation2 + $0x48] sm:$0xff]
      %v350 = vld [vmem:[#allocation2 + $0x50] sm:$0xff]
      %v351 = vld [vmem:[#allocation2 + $0x58] sm:$0xff]
      %v352 = vld [vmem:[#allocation2 + $0x60] sm:$0xff]
      %v353 = vld [vmem:[#allocation2 + $0x68] sm:$0xff]
      %v354 = vld [vmem:[#allocation2 + $0x70] sm:$0xff]
      %v355 = vld [vmem:[#allocation2 + $0x78] sm:$0xff]
      %v356 = vld [vmem:[#allocation8] sm:$0xff]
      %v357 = vld [vmem:[#allocation8 + $0x8] sm:$0xff]
      %v358 = vld [vmem:[#allocation8 + $0x10] sm:$0xff]
      %v359 = vld [vmem:[#allocation8 + $0x18] sm:$0xff]
      %v360 = vld [vmem:[#allocation8 + $0x20] sm:$0xff]
      %v361 = vld [vmem:[#allocation8 + $0x28] sm:$0xff]
      %v362 = vld [vmem:[#allocation8 + $0x30] sm:$0xff]
      %v363 = vld [vmem:[#allocation8 + $0x38] sm:$0xff]
      %v364 = vld [vmem:[#allocation8 + $0x40] sm:$0xff]
      %v365 = vld [vmem:[#allocation8 + $0x48] sm:$0xff]
      %v366 = vld [vmem:[#allocation8 + $0x50] sm:$0xff]
      %v367 = vld [vmem:[#allocation8 + $0x58] sm:$0xff]
      %v368 = vld [vmem:[#allocation8 + $0x60] sm:$0xff]
      %v369 = vld [vmem:[#allocation8 + $0x68] sm:$0xff]
      %v370 = vld [vmem:[#allocation8 + $0x70] sm:$0xff]
      %v371 = vld [vmem:[#allocation8 + $0x78] sm:$0xff]
      %v372 = vmul.f32 %v340, %v356
      %v373 = vmul.f32 %v341, %v357
      %v374 = vmul.f32 %v342, %v358
      %v375 = vmul.f32 %v343, %v359
      %v376 = vmul.f32 %v344, %v360
      %v377 = vmul.f32 %v345, %v361
      %v378 = vmul.f32 %v346, %v362
      %v379 = vmul.f32 %v347, %v363
      %v380 = vmul.f32 %v348, %v364
      %v381 = vmul.f32 %v349, %v365
      %v382 = vmul.f32 %v350, %v366
      %v383 = vmul.f32 %v351, %v367
      %v384 = vmul.f32 %v352, %v368
      %v385 = vmul.f32 %v353, %v369
      %v386 = vmul.f32 %v354, %v370
      %v387 = vmul.f32 %v355, %v371
      %388 = vadd.xlane.f32.xlu0 %v372
      %v389 = vpop.xlane.xlu0 %388
      %390 = vadd.xlane.f32.xlu0 %v373
      %v391 = vpop.xlane.xlu0 %390
      %392 = vadd.xlane.f32.xlu0 %v374
      %v393 = vpop.xlane.xlu0 %392
      %394 = vadd.xlane.f32.xlu0 %v375
      %v395 = vpop.xlane.xlu0 %394
      %396 = vadd.xlane.f32.xlu0 %v376
      %v397 = vpop.xlane.xlu0 %396
      %398 = vadd.xlane.f32.xlu0 %v377
      %v399 = vpop.xlane.xlu0 %398
      %400 = vadd.xlane.f32.xlu0 %v378
      %v401 = vpop.xlane.xlu0 %400
      %402 = vadd.xlane.f32.xlu0 %v379
      %v403 = vpop.xlane.xlu0 %402
      %404 = vadd.xlane.f32.xlu0 %v380
      %v405 = vpop.xlane.xlu0 %404
      %406 = vadd.xlane.f32.xlu0 %v381
      %v407 = vpop.xlane.xlu0 %406
      %408 = vadd.xlane.f32.xlu0 %v382
      %v409 = vpop.xlane.xlu0 %408
      %410 = vadd.xlane.f32.xlu0 %v383
      %v411 = vpop.xlane.xlu0 %410
      %412 = vadd.xlane.f32.xlu0 %v384
      %v413 = vpop.xlane.xlu0 %412
      %414 = vadd.xlane.f32.xlu0 %v385
      %v415 = vpop.xlane.xlu0 %414
      %416 = vadd.xlane.f32.xlu0 %v386
      %v417 = vpop.xlane.xlu0 %416
      %418 = vadd.xlane.f32.xlu0 %v387
      %v419 = vpop.xlane.xlu0 %418
      %v420 = vadd.f32 %v389, %v391
      %v421 = vadd.f32 %v420, %v393
      %v422 = vadd.f32 %v421, %v395
      %v423 = vadd.f32 %v422, %v397
      %v424 = vadd.f32 %v423, %v399
      %v425 = vadd.f32 %v424, %v401
      %v426 = vadd.f32 %v425, %v403
      %v427 = vadd.f32 %v426, %v405
      %v428 = vadd.f32 %v427, %v407
      %v429 = vadd.f32 %v428, %v409
      %v430 = vadd.f32 %v429, %v411
      %v431 = vadd.f32 %v430, %v413
      %v432 = vadd.f32 %v431, %v415
      %v433 = vadd.f32 %v432, %v417
      %v434 = vadd.f32 %v433, %v419
      %v435 = vrot.slane %v434, 4
      %v436 = vadd.f32 %v434, %v435
      %v437 = vrot.slane %v436, 2
      %v438 = vadd.f32 %v436, %v437
      %v439 = vrot.slane %v438, 1
      %v440 = vadd.f32 %v438, %v439
      %v441 = vrcp.pop 2.0
      %v442 = vmul.f32 %v440, %v441
      %443 = vst [vmem:[#allocation9] sm:$0x1] %v442
    $region33: #{tpu_custom_call.1} parent=1 // pred_fallthru
      _
    // Predicated region
    $region34: #{tpu_custom_call.1} parent=1 // pred_check
      _
    $region35: #{tpu_custom_call.1} parent=1 // pred_check_branch
      %445 = sbr.rel (0) target = $region37
    $region36: #{tpu_custom_call.1} parent=1 // pred_region
      %s447 = ssub.s32 16, 16
      %448 = vsyncadd [#allocation5], %s447
      %s450 = sshll.u32 [#allocation9], 4
      %s451 = int_to_ptr.vmem [resolvable:$true] %s450
      %453 = dma.vmem_to_hbm [thread:$0]  %s451, 16, %s3, [#allocation5]
    $region37: #{tpu_custom_call.1} parent=1 // pred_fallthru
      _
    // Predicated region
    $region38: #{tpu_custom_call.1} parent=1 // pred_check
      _
    $region39: #{tpu_custom_call.1} parent=1 // pred_check_branch
      %455 = sbr.rel (0) target = $region41
    $region40: #{tpu_custom_call.1} parent=1 // pred_region
      %456 = dma.done [#allocation5], 16
    $region41: #{tpu_custom_call.1} parent=1 // pred_fallthru
      _
    %457 = vsyncpa [#allocation4], 1
    %458 = vsyncpa [#allocation7], 1
    %459 = vsyncpa [#allocation5], 1

</llo_original>
